<compile_context>
chip_gen: v7x
topology: tpu7x:2x2x1
jax: 0.10.0
libtpu: 0.0.40
codegen_flags: <defaults>
</compile_context>

<pallas_src>
import functools

import jax
import jax.numpy as jnp
from jax.experimental import pallas as pl
from jax.experimental.pallas import tpu as pltpu


def _gat_fused_kernel(*refs, layer_cfgs, negative_slope):
    """Fused forward of a stack of GATConv layers (whole graph resident in VMEM).

    refs layout:
      refs[0]        feat      (N, F_in)
      refs[1]        edge2d    (N_dst, N_src*F_e)
      refs[2]        adj       (N_dst, N_src)
      refs[3]        w_ee_exp  (N_src*F_e, Htot*N_src)   block-expanded (W_edge.attn_e)
      refs[4:4+L]    w_all_l   (F_in_l, H_l*D_l + 2*H_l) [W_node | W.attn_h | W.attn_t]
      refs[4+L]      bias_all  (1, sum_l out_w_l)  (flattened bias / head-mean bias)
      refs[5+L]      out       (N, out_cols)
    """
    n_layers = len(layer_cfgs)
    feat_ref, edge_ref, adj_ref, w_ee_ref = refs[0], refs[1], refs[2], refs[3]
    w_all_refs = refs[4:4 + n_layers]
    bias_ref = refs[4 + n_layers]
    out_ref = refs[5 + n_layers]

    N = adj_ref.shape[0]
    adj = adj_ref[...]                              # (N_dst, N_src) float 0/1
    # Additive softmax mask, hoisted: 0 on edges, -1e30 off-edge (f32; bf16 would overflow).
    mask_add = (adj - 1.0) * jnp.float32(1e30)
    bias_all = bias_ref[...]                        # (1, sum out_w_l)

    # ee attention scores for ALL heads of ALL layers in one MXU matmul.
    # ee_big[dst, g*N + src] = sum_f edge_attr[dst, src, f] * w_ee[f, g]
    ee_big = jnp.dot(edge_ref[...], w_ee_ref[...],
                     preferred_element_type=jnp.float32)        # (N, Htot*N)

    x = feat_ref[...]
    head_base = 0                                   # global head offset into ee_big columns
    bias_base = 0                                   # column offset into bias_all
    for li, (H, D, apply_relu, concat_out) in enumerate(layer_cfgs):
        HD = H * D
        # fc(x) together with the folded eh / et scores: one matmul -> (N, HD + 2H)
        proj = jnp.dot(x, w_all_refs[li][...], preferred_element_type=jnp.float32)
        feat_src = proj[:, :HD]                     # (N, H*D) projected node features

        parts = []
        for hh in range(H):                         # H <= 2: tiny static loop; heavy math is head-dense
            fs = feat_src[:, hh * D:(hh + 1) * D]                  # (N, D)
            # eh: src score, et: dst score. Both derive from feat_src because the
            # graph is homogeneous with a shared fc (src feats == dst feats).
            eh = proj[:, HD + hh:HD + hh + 1]                      # (N, 1)
            et = proj[:, HD + H + hh:HD + H + hh + 1]              # (N, 1)
            g = head_base + hh
            ee = ee_big[:, g * N:(g + 1) * N]                      # (N_dst, N_src) lane slice

            # e = leaky_relu(eh[src] + ee + et[dst])
            logits = eh.T + ee + et                                # (N_dst, N_src)
            logits = jnp.where(logits >= 0, logits, negative_slope * logits)

            # edge_softmax over incoming edges of each dst (masked softmax over src).
            logits = logits + mask_add
            m = jnp.max(logits, axis=1, keepdims=True)
            p = jnp.exp(logits - m) * adj
            denom = jnp.sum(p, axis=1, keepdims=True)              # >= 1 given self-loops
            a = p * pl.reciprocal(denom, approx=True)              # divide on the EUP slot

            # update_all(u_mul_e('hs','a','m'), sum): attention-weighted aggregation.
            parts.append(jnp.dot(a, fs, preferred_element_type=jnp.float32))   # (N, D)

        if concat_out:                              # heads concatenated (flatten(1))
            x = parts[0] if H == 1 else jnp.concatenate(parts, axis=-1)        # (N, H*D)
            out_w = HD
        else:                                       # mean over heads
            s = parts[0]
            for extra in parts[1:]:
                s = s + extra
            x = s * jnp.float32(1.0 / H)
            out_w = D
        # bias once per layer (flattened for concat, head-mean for mean; see wrapper)
        x = x + bias_all[:, bias_base:bias_base + out_w]
        if apply_relu:                              # per-layer activation (relu); norm=None
            x = jnp.maximum(x, 0.0)
        head_base += H
        bias_base += out_w

    out_ref[...] = x                                # single lane-dense store


def _fold_layer(params, n_heads, concat_out):
    """Fold attn_h/attn_t into the node projection and attn_e into the edge projection."""
    w_node = params["w_node"]                        # (F_in, H*D)
    w_edge = params["w_edge"]                        # (F_e,  H*D)
    f_in, hd = w_node.shape
    f_e = w_edge.shape[0]
    h = n_heads
    d = hd // h
    wn3 = w_node.reshape(f_in, h, d)
    w_eh = jnp.einsum("fhd,hd->fh", wn3, params["attn_h"])     # (F_in, H)
    w_et = jnp.einsum("fhd,hd->fh", wn3, params["attn_t"])     # (F_in, H)
    w_all = jnp.concatenate([w_node, w_eh, w_et], axis=1)      # (F_in, HD + 2H)
    w_ee = jnp.einsum("fhd,hd->fh", w_edge.reshape(f_e, h, d), params["attn_e"])  # (F_e, H)
    if concat_out:
        bias_row = params["bias"].reshape(1, hd)                # (1, HD)  (bias then flatten)
    else:
        bias_row = params["bias"].mean(axis=0, keepdims=True)   # (1, D)   (bias then head-mean)
    return w_all, w_ee, bias_row


def gat_forward(layer_params, layer_cfgs, feat, edge_attr, adj):
    """Fused multi-layer GATConv forward as a single pallas_call.

    edge_attr: (N, N, F_e) indexed [dst, src, :]; adj: (N_dst, N_src) in {0., 1.}.
    """
    n = feat.shape[0]
    f_e = edge_attr.shape[-1]

    w_alls, w_ees, biases, kcfgs = [], [], [], []
    for p, cfg in zip(layer_params, layer_cfgs):
        h = cfg["n_heads"]
        hd = p["w_node"].shape[1]
        d = hd // h
        concat_out = bool(cfg.get("concat_out", True))
        w_all, w_ee, b = _fold_layer(p, h, concat_out)
        w_alls.append(w_all)
        w_ees.append(w_ee)
        biases.append(b)
        kcfgs.append((h, d, bool(cfg.get("apply_relu", False)), concat_out))

    w_ee_cat = jnp.concatenate(w_ees, axis=1)            # (F_e, Htot)
    h_tot = w_ee_cat.shape[1]
    # Block-expand the folded edge weights so ONE matmul yields ee for every head with
    # N_src on the lane axis:  w_ee_exp[s*F_e+f, g*N+t] = w_ee_cat[f, g] * (s == t).
    # O(N) extra FLOPs vs the flat (N*N,F_e)@(F_e,Htot) form, but keeps every per-head
    # use a plain lane slice (no in-kernel reshape/transpose) and makes the edge
    # operand lane-dense.  For large N switch back to the flat form + dst-row tiling.
    w_ee_exp = jnp.einsum("fg,st->sfgt", w_ee_cat,
                          jnp.eye(n, dtype=w_ee_cat.dtype)).reshape(n * f_e, h_tot * n)
    bias_all = jnp.concatenate(biases, axis=1)           # (1, sum out_w_l)
    edge2d = edge_attr.reshape(n, n * f_e)               # (N_dst, N_src*F_e), lane-dense

    last_h, last_d, _, last_concat = kcfgs[-1]
    out_cols = last_h * last_d if last_concat else last_d
    negative_slope = float(layer_cfgs[0].get("negative_slope", 0.2))

    kernel = functools.partial(_gat_fused_kernel,
                               layer_cfgs=tuple(kcfgs),
                               negative_slope=negative_slope)
    vmem = pl.BlockSpec(memory_space=pltpu.MemorySpace.VMEM)
    n_inputs = 5 + len(layer_params)   # feat, edge2d, adj, w_ee_exp, w_all_l..., bias_all
    # TODO(synk): for non-toy graphs add a dst-row grid (tile adj/edge2d/out on a
    # "parallel" axis) and cast MXU operands to bf16 on v6e/v7x; at this toy size the
    # whole graph fits in VMEM and the call is launch/DMA-bound, so f32 is kept to
    # match the torch float32 semantics.
    return pl.pallas_call(
        kernel,
        out_shape=jax.ShapeDtypeStruct((n, out_cols), jnp.float32),
        in_specs=[vmem] * n_inputs,
        out_specs=vmem,
    )(feat, edge2d, adj, w_ee_exp, *w_alls, bias_all)


# ---------------- deterministic parameter init (matches module shapes) ----------------

def _xavier_normal(key, shape, fan_in, fan_out, gain):
    std = gain * (2.0 / (fan_in + fan_out)) ** 0.5
    return std * jax.random.normal(key, shape, dtype=jnp.float32)


def init_gatconv(key, in_dim, e_dim, out_dim, n_heads):
    gain = 2.0 ** 0.5  # nn.init.calculate_gain('relu')
    ks = jax.random.split(key, 5)
    hd = out_dim * n_heads
    return dict(
        # stored as (in, out) so kernel does feat @ W  (torch Linear weight is (out, in))
        w_node=_xavier_normal(ks[0], (in_dim, hd), in_dim, hd, gain),
        w_edge=_xavier_normal(ks[1], (e_dim, hd), e_dim, hd, gain),
        # torch attn params have shape (1, H, D): fan_in = H*D, fan_out = D
        attn_h=_xavier_normal(ks[2], (n_heads, out_dim), n_heads * out_dim, out_dim, gain),
        attn_e=_xavier_normal(ks[3], (n_heads, out_dim), n_heads * out_dim, out_dim, gain),
        attn_t=_xavier_normal(ks[4], (n_heads, out_dim), n_heads * out_dim, out_dim, gain),
        bias=jnp.zeros((n_heads, out_dim), jnp.float32),
    )
    # NOTE: fc_node_embedding exists in __init__ but is never used in forward -> omitted.


if __name__ == "__main__":
    # 2-layer GAT: feat_drop=attn_drop=0 (dropout == identity), residual=False,
    # norm=None, encoding=False (no activation on the last layer).
    # concat_out=True is used so stacked layers match dims (layer l+1 expects hidden*heads).
    N = 16
    n_dim, e_dim, hidden_dim, out_dim = 8, 8, 8, 8
    n_heads, n_heads_out = 2, 1
    negative_slope = 0.2

    key = jax.random.PRNGKey(0)
    k_feat, k_edge, k_adj, k_p0, k_p1 = jax.random.split(key, 5)

    feat = jax.random.normal(k_feat, (N, n_dim), dtype=jnp.float32)

    # random sparse graph + self loops (guarantees nonzero in-degree for edge_softmax)
    adj = (jax.random.uniform(k_adj, (N, N)) < 0.25).astype(jnp.float32)
    adj = jnp.maximum(adj, jnp.eye(N, dtype=jnp.float32))
    edge_attr = jax.random.normal(k_edge, (N, N, e_dim), dtype=jnp.float32)
    edge_attr = edge_attr * adj[:, :, None]          # zero attrs where no edge

    params = [
        init_gatconv(k_p0, n_dim, e_dim, hidden_dim, n_heads),
        init_gatconv(k_p1, hidden_dim * n_heads, e_dim, out_dim, n_heads_out),
    ]
    cfgs = [
        # create_activation('relu') for intermediate layers
        dict(n_heads=n_heads, negative_slope=negative_slope,
             apply_relu=True, concat_out=True),
        # encoding=False -> last layer activation is None
        dict(n_heads=n_heads_out, negative_slope=negative_slope,
             apply_relu=False, concat_out=True),
    ]

    fwd = jax.jit(functools.partial(gat_forward, params, cfgs))
    out = fwd(feat, edge_attr, adj)
    jax.block_until_ready(out)
    assert out.shape == (N, out_dim * n_heads_out), out.shape
    assert bool(jnp.all(jnp.isfinite(out)))
    # TODO(synk): norm=LayerNorm/BatchNorm, nonzero dropout, residual, and batched
    # multi-graph inputs are not exercised by this toy config.
    print("KERNEL_OK")
</pallas_src>

<mosaic_0001>
module attributes {stable_mosaic.version = 11 : i64} {
  func.func @_gat_fused_kernel(%arg0: memref<16x8xf32, #tpu.memory_space<vmem>>, %arg1: memref<16x128xf32, #tpu.memory_space<vmem>>, %arg2: memref<16x16xf32, #tpu.memory_space<vmem>>, %arg3: memref<128x48xf32, #tpu.memory_space<vmem>>, %arg4: memref<8x20xf32, #tpu.memory_space<vmem>>, %arg5: memref<16x10xf32, #tpu.memory_space<vmem>>, %arg6: memref<1x24xf32, #tpu.memory_space<vmem>>, %arg7: memref<16x8xf32, #tpu.memory_space<vmem>>) attributes {dimension_semantics = [], scalar_prefetch = 0 : i64, scratch_operands = 0 : i64, tpu.core_type = #tpu.core_type<tc>} {
    %c0 = arith.constant 0 : index
    %c0_0 = arith.constant 0 : index
    %0 = vector.load %arg2[%c0, %c0_0] : memref<16x16xf32, #tpu.memory_space<vmem>>, vector<16x16xf32>
    %cst = arith.constant 1.000000e+00 : f32
    %1 = vector.broadcast %cst : f32 to vector<16x16xf32>
    %2 = arith.subf %0, %1 : vector<16x16xf32>
    %cst_1 = arith.constant 1.000000e+30 : f32
    %3 = vector.broadcast %cst_1 : f32 to vector<16x16xf32>
    %4 = arith.mulf %2, %3 : vector<16x16xf32>
    %c0_2 = arith.constant 0 : index
    %c0_3 = arith.constant 0 : index
    %5 = vector.load %arg6[%c0_2, %c0_3] : memref<1x24xf32, #tpu.memory_space<vmem>>, vector<1x24xf32>
    %c0_4 = arith.constant 0 : index
    %c0_5 = arith.constant 0 : index
    %6 = vector.load %arg1[%c0_4, %c0_5] : memref<16x128xf32, #tpu.memory_space<vmem>>, vector<16x128xf32>
    %c0_6 = arith.constant 0 : index
    %c0_7 = arith.constant 0 : index
    %7 = vector.load %arg3[%c0_6, %c0_7] : memref<128x48xf32, #tpu.memory_space<vmem>>, vector<128x48xf32>
    %cst_8 = arith.constant dense<0.000000e+00> : vector<16x48xf32>
    %8 = tpu.matmul %6, %7, %cst_8 {dimension_numbers = #tpu.dot_dimension_numbers<[1], [0], [0], [1], [0, 0, 1, 1], [], []>} : vector<16x128xf32>, vector<128x48xf32>, vector<16x48xf32> -> vector<16x48xf32>
    %c0_9 = arith.constant 0 : index
    %c0_10 = arith.constant 0 : index
    %9 = vector.load %arg0[%c0_9, %c0_10] : memref<16x8xf32, #tpu.memory_space<vmem>>, vector<16x8xf32>
    %c0_11 = arith.constant 0 : index
    %c0_12 = arith.constant 0 : index
    %10 = vector.load %arg4[%c0_11, %c0_12] : memref<8x20xf32, #tpu.memory_space<vmem>>, vector<8x20xf32>
    %cst_13 = arith.constant dense<0.000000e+00> : vector<16x20xf32>
    %11 = tpu.matmul %9, %10, %cst_13 {dimension_numbers = #tpu.dot_dimension_numbers<[1], [0], [0], [1], [0, 0, 1, 1], [], []>} : vector<16x8xf32>, vector<8x20xf32>, vector<16x20xf32> -> vector<16x20xf32>
    %12 = vector.extract_strided_slice %11 {offsets = [0, 0], sizes = [16, 16], strides = [1, 1]} : vector<16x20xf32> to vector<16x16xf32>
    %13 = vector.extract_strided_slice %12 {offsets = [0, 0], sizes = [16, 8], strides = [1, 1]} : vector<16x16xf32> to vector<16x8xf32>
    %14 = vector.extract_strided_slice %11 {offsets = [0, 16], sizes = [16, 1], strides = [1, 1]} : vector<16x20xf32> to vector<16x1xf32>
    %15 = vector.extract_strided_slice %11 {offsets = [0, 18], sizes = [16, 1], strides = [1, 1]} : vector<16x20xf32> to vector<16x1xf32>
    %16 = vector.extract_strided_slice %8 {offsets = [0, 0], sizes = [16, 16], strides = [1, 1]} : vector<16x48xf32> to vector<16x16xf32>
    %17 = tpu.transpose %14, [1, 0] : vector<16x1xf32> -> vector<1x16xf32>
    %18 = vector.broadcast %17 : vector<1x16xf32> to vector<16x16xf32>
    %19 = arith.addf %18, %16 : vector<16x16xf32>
    %20 = vector.broadcast %15 : vector<16x1xf32> to vector<16x16xf32>
    %21 = arith.addf %19, %20 : vector<16x16xf32>
    %cst_14 = arith.constant 0.000000e+00 : f32
    %22 = vector.broadcast %cst_14 : f32 to vector<16x16xf32>
    %23 = arith.cmpf oge, %21, %22 : vector<16x16xf32>
    %cst_15 = arith.constant 2.000000e-01 : f32
    %24 = vector.broadcast %cst_15 : f32 to vector<16x16xf32>
    %25 = arith.mulf %24, %21 : vector<16x16xf32>
    %26 = arith.select %23, %21, %25 : vector<16x16xi1>, vector<16x16xf32>
    %27 = arith.addf %26, %4 : vector<16x16xf32>
    %cst_16 = arith.constant dense<0xFF800000> : vector<16xf32>
    %28 = vector.multi_reduction <maximumf>, %27, %cst_16 [1] : vector<16x16xf32> to vector<16xf32>
    %29 = vector.shape_cast %28 : vector<16xf32> to vector<16x1xf32>
    %30 = vector.broadcast %29 : vector<16x1xf32> to vector<16x16xf32>
    %31 = arith.subf %27, %30 : vector<16x16xf32>
    %32 = math.exp %31 : vector<16x16xf32>
    %33 = arith.mulf %32, %0 : vector<16x16xf32>
    %cst_17 = arith.constant dense<0.000000e+00> : vector<16xf32>
    %34 = vector.multi_reduction <add>, %33, %cst_17 [1] : vector<16x16xf32> to vector<16xf32>
    %35 = vector.shape_cast %34 : vector<16xf32> to vector<16x1xf32>
    %36 = tpu.reciprocal %35 {approx = true} : vector<16x1xf32> -> vector<16x1xf32>
    %37 = vector.broadcast %36 : vector<16x1xf32> to vector<16x16xf32>
    %38 = arith.mulf %33, %37 : vector<16x16xf32>
    %cst_18 = arith.constant dense<0.000000e+00> : vector<16x8xf32>
    %39 = tpu.matmul %38, %13, %cst_18 {dimension_numbers = #tpu.dot_dimension_numbers<[1], [0], [0], [1], [0, 0, 1, 1], [], []>} : vector<16x16xf32>, vector<16x8xf32>, vector<16x8xf32> -> vector<16x8xf32>
    %40 = vector.extract_strided_slice %12 {offsets = [0, 8], sizes = [16, 8], strides = [1, 1]} : vector<16x16xf32> to vector<16x8xf32>
    %41 = vector.extract_strided_slice %11 {offsets = [0, 17], sizes = [16, 1], strides = [1, 1]} : vector<16x20xf32> to vector<16x1xf32>
    %42 = vector.extract_strided_slice %11 {offsets = [0, 19], sizes = [16, 1], strides = [1, 1]} : vector<16x20xf32> to vector<16x1xf32>
    %43 = vector.extract_strided_slice %8 {offsets = [0, 16], sizes = [16, 16], strides = [1, 1]} : vector<16x48xf32> to vector<16x16xf32>
    %44 = tpu.transpose %41, [1, 0] : vector<16x1xf32> -> vector<1x16xf32>
    %45 = vector.broadcast %44 : vector<1x16xf32> to vector<16x16xf32>
    %46 = arith.addf %45, %43 : vector<16x16xf32>
    %47 = vector.broadcast %42 : vector<16x1xf32> to vector<16x16xf32>
    %48 = arith.addf %46, %47 : vector<16x16xf32>
    %cst_19 = arith.constant 0.000000e+00 : f32
    %49 = vector.broadcast %cst_19 : f32 to vector<16x16xf32>
    %50 = arith.cmpf oge, %48, %49 : vector<16x16xf32>
    %cst_20 = arith.constant 2.000000e-01 : f32
    %51 = vector.broadcast %cst_20 : f32 to vector<16x16xf32>
    %52 = arith.mulf %51, %48 : vector<16x16xf32>
    %53 = arith.select %50, %48, %52 : vector<16x16xi1>, vector<16x16xf32>
    %54 = arith.addf %53, %4 : vector<16x16xf32>
    %cst_21 = arith.constant dense<0xFF800000> : vector<16xf32>
    %55 = vector.multi_reduction <maximumf>, %54, %cst_21 [1] : vector<16x16xf32> to vector<16xf32>
    %56 = vector.shape_cast %55 : vector<16xf32> to vector<16x1xf32>
    %57 = vector.broadcast %56 : vector<16x1xf32> to vector<16x16xf32>
    %58 = arith.subf %54, %57 : vector<16x16xf32>
    %59 = math.exp %58 : vector<16x16xf32>
    %60 = arith.mulf %59, %0 : vector<16x16xf32>
    %cst_22 = arith.constant dense<0.000000e+00> : vector<16xf32>
    %61 = vector.multi_reduction <add>, %60, %cst_22 [1] : vector<16x16xf32> to vector<16xf32>
    %62 = vector.shape_cast %61 : vector<16xf32> to vector<16x1xf32>
    %63 = tpu.reciprocal %62 {approx = true} : vector<16x1xf32> -> vector<16x1xf32>
    %64 = vector.broadcast %63 : vector<16x1xf32> to vector<16x16xf32>
    %65 = arith.mulf %60, %64 : vector<16x16xf32>
    %cst_23 = arith.constant dense<0.000000e+00> : vector<16x8xf32>
    %66 = tpu.matmul %65, %40, %cst_23 {dimension_numbers = #tpu.dot_dimension_numbers<[1], [0], [0], [1], [0, 0, 1, 1], [], []>} : vector<16x16xf32>, vector<16x8xf32>, vector<16x8xf32> -> vector<16x8xf32>
    %67 = tpu.concatenate %39, %66 in 1 : vector<16x8xf32>, vector<16x8xf32> -> vector<16x16xf32>
    %68 = vector.extract_strided_slice %5 {offsets = [0, 0], sizes = [1, 16], strides = [1, 1]} : vector<1x24xf32> to vector<1x16xf32>
    %69 = vector.broadcast %68 : vector<1x16xf32> to vector<16x16xf32>
    %70 = arith.addf %67, %69 : vector<16x16xf32>
    %cst_24 = arith.constant 0.000000e+00 : f32
    %71 = vector.broadcast %cst_24 : f32 to vector<16x16xf32>
    %72 = arith.maximumf %70, %71 : vector<16x16xf32>
    %c0_25 = arith.constant 0 : index
    %c0_26 = arith.constant 0 : index
    %73 = vector.load %arg5[%c0_25, %c0_26] : memref<16x10xf32, #tpu.memory_space<vmem>>, vector<16x10xf32>
    %cst_27 = arith.constant dense<0.000000e+00> : vector<16x10xf32>
    %74 = tpu.matmul %72, %73, %cst_27 {dimension_numbers = #tpu.dot_dimension_numbers<[1], [0], [0], [1], [0, 0, 1, 1], [], []>} : vector<16x16xf32>, vector<16x10xf32>, vector<16x10xf32> -> vector<16x10xf32>
    %75 = vector.extract_strided_slice %74 {offsets = [0, 0], sizes = [16, 8], strides = [1, 1]} : vector<16x10xf32> to vector<16x8xf32>
    %76 = vector.extract_strided_slice %74 {offsets = [0, 8], sizes = [16, 1], strides = [1, 1]} : vector<16x10xf32> to vector<16x1xf32>
    %77 = vector.extract_strided_slice %74 {offsets = [0, 9], sizes = [16, 1], strides = [1, 1]} : vector<16x10xf32> to vector<16x1xf32>
    %78 = vector.extract_strided_slice %8 {offsets = [0, 32], sizes = [16, 16], strides = [1, 1]} : vector<16x48xf32> to vector<16x16xf32>
    %79 = tpu.transpose %76, [1, 0] : vector<16x1xf32> -> vector<1x16xf32>
    %80 = vector.broadcast %79 : vector<1x16xf32> to vector<16x16xf32>
    %81 = arith.addf %80, %78 : vector<16x16xf32>
    %82 = vector.broadcast %77 : vector<16x1xf32> to vector<16x16xf32>
    %83 = arith.addf %81, %82 : vector<16x16xf32>
    %cst_28 = arith.constant 0.000000e+00 : f32
    %84 = vector.broadcast %cst_28 : f32 to vector<16x16xf32>
    %85 = arith.cmpf oge, %83, %84 : vector<16x16xf32>
    %cst_29 = arith.constant 2.000000e-01 : f32
    %86 = vector.broadcast %cst_29 : f32 to vector<16x16xf32>
    %87 = arith.mulf %86, %83 : vector<16x16xf32>
    %88 = arith.select %85, %83, %87 : vector<16x16xi1>, vector<16x16xf32>
    %89 = arith.addf %88, %4 : vector<16x16xf32>
    %cst_30 = arith.constant dense<0xFF800000> : vector<16xf32>
    %90 = vector.multi_reduction <maximumf>, %89, %cst_30 [1] : vector<16x16xf32> to vector<16xf32>
    %91 = vector.shape_cast %90 : vector<16xf32> to vector<16x1xf32>
    %92 = vector.broadcast %91 : vector<16x1xf32> to vector<16x16xf32>
    %93 = arith.subf %89, %92 : vector<16x16xf32>
    %94 = math.exp %93 : vector<16x16xf32>
    %95 = arith.mulf %94, %0 : vector<16x16xf32>
    %cst_31 = arith.constant dense<0.000000e+00> : vector<16xf32>
    %96 = vector.multi_reduction <add>, %95, %cst_31 [1] : vector<16x16xf32> to vector<16xf32>
    %97 = vector.shape_cast %96 : vector<16xf32> to vector<16x1xf32>
    %98 = tpu.reciprocal %97 {approx = true} : vector<16x1xf32> -> vector<16x1xf32>
    %99 = vector.broadcast %98 : vector<16x1xf32> to vector<16x16xf32>
    %100 = arith.mulf %95, %99 : vector<16x16xf32>
    %cst_32 = arith.constant dense<0.000000e+00> : vector<16x8xf32>
    %101 = tpu.matmul %100, %75, %cst_32 {dimension_numbers = #tpu.dot_dimension_numbers<[1], [0], [0], [1], [0, 0, 1, 1], [], []>} : vector<16x16xf32>, vector<16x8xf32>, vector<16x8xf32> -> vector<16x8xf32>
    %102 = vector.extract_strided_slice %5 {offsets = [0, 16], sizes = [1, 8], strides = [1, 1]} : vector<1x24xf32> to vector<1x8xf32>
    %103 = vector.broadcast %102 : vector<1x8xf32> to vector<16x8xf32>
    %104 = arith.addf %101, %103 : vector<16x8xf32>
    %c0_33 = arith.constant 0 : index
    %c0_34 = arith.constant 0 : index
    %105 = vector.load %arg7[%c0_33, %c0_34] : memref<16x8xf32, #tpu.memory_space<vmem>>, vector<16x8xf32>
    tpu.vector_store %arg7[%c0_33, %c0_34], %104 {strides = array<i32>} : memref<16x8xf32, #tpu.memory_space<vmem>>, vector<16x8xf32>,
    return
  }
}

</mosaic_0001>

<llo_original>
// kernel: gat_forward.1
$region0: #{gat_forward.1}
  #allocation0 [shape = 'u32[]', space=smem, size = 0x4, offset = 0x4, fixed_abs, tag = 'smem constant byte address 0x4 - core index']
  #allocation1 [shape = 'u32[144,128]{1,0:T(1,128)}', space=vmem, size = 0x12000, scoped, tag = 'internal scratch']
  %s0 = inlined_call_operand.vmem [shape: f32[16,8], index: 0, kind: input, shape index: {}]
  %s1 = inlined_call_operand.vmem [shape: f32[16,128], index: 1, kind: input, shape index: {}]
  %s2 = inlined_call_operand.vmem [shape: f32[16,16], index: 2, kind: input, shape index: {}]
  %s3 = inlined_call_operand.vmem [shape: f32[128,48], index: 3, kind: input, shape index: {}]
  %s4 = inlined_call_operand.vmem [shape: f32[8,20], index: 4, kind: input, shape index: {}]
  %s5 = inlined_call_operand.vmem [shape: f32[16,10], index: 5, kind: input, shape index: {}]
  %s6 = inlined_call_operand.vmem [shape: f32[1,24], index: 6, kind: input, shape index: {}]
  %s7 = inlined_call_operand.vmem [shape: f32[16,8], index: 7, kind: output, shape index: {}]
  %s8 = sld [smem:[#allocation0]]
  $region38: #{gat_forward.1} parent=0
    _
  %s10 = ssub.s32 1, %s8
  %s11 = scalar_select 0, %s10, %s8
  // Predicated region
  $region2: #{gat_forward.1} parent=0 // pred_check
    _
  $region3: #{gat_forward.1} parent=0 // pred_check_branch
    %13 = sbr.rel (0) target = $region5
  $region4: #{gat_forward.1} parent=0 // pred_region
    _
  $region5: #{gat_forward.1} parent=0 // pred_fallthru
    _
  // Predicated region
  $region6: #{gat_forward.1} parent=0 // pred_check
    _
  $region7: #{gat_forward.1} parent=0 // pred_check_branch
    %15 = sbr.rel (0) target = $region9
  $region8: #{gat_forward.1} parent=0 // pred_region
    _
  $region9: #{gat_forward.1} parent=0 // pred_fallthru
    _
  // Predicated region
  $region10: #{gat_forward.1} parent=0 // pred_check
    _
  $region11: #{gat_forward.1} parent=0 // pred_check_branch
    %17 = sbr.rel (0) target = $region13
  $region12: #{gat_forward.1} parent=0 // pred_region
    _
  $region13: #{gat_forward.1} parent=0 // pred_fallthru
    _
  // Predicated region
  $region14: #{gat_forward.1} parent=0 // pred_check
    _
  $region15: #{gat_forward.1} parent=0 // pred_check_branch
    %19 = sbr.rel (0) target = $region17
  $region16: #{gat_forward.1} parent=0 // pred_region
    _
  $region17: #{gat_forward.1} parent=0 // pred_fallthru
    _
  // Predicated region
  $region18: #{gat_forward.1} parent=0 // pred_check
    _
  $region19: #{gat_forward.1} parent=0 // pred_check_branch
    %21 = sbr.rel (0) target = $region21
  $region20: #{gat_forward.1} parent=0 // pred_region
    _
  $region21: #{gat_forward.1} parent=0 // pred_fallthru
    _
  // Predicated region
  $region22: #{gat_forward.1} parent=0 // pred_check
    _
  $region23: #{gat_forward.1} parent=0 // pred_check_branch
    %23 = sbr.rel (0) target = $region25
  $region24: #{gat_forward.1} parent=0 // pred_region
    _
  $region25: #{gat_forward.1} parent=0 // pred_fallthru
    _
  // Predicated region
  $region26: #{gat_forward.1} parent=0 // pred_check
    _
  $region27: #{gat_forward.1} parent=0 // pred_check_branch
    %25 = sbr.rel (0) target = $region29
  $region28: #{gat_forward.1} parent=0 // pred_region
    _
  $region29: #{gat_forward.1} parent=0 // pred_fallthru
    _
  %v26 = vld [vmem:[%s2] sm:$0xff]
  %v27 = vld [vmem:[%s2 + $0x8] sm:$0xff]
  %v28 = vsub.f32 %v26, 1.0
  %v29 = vsub.f32 %v27, 1.0
  %v30 = vmul.f32 %v28, 1e+30
  %v31 = vmul.f32 %v29, 1e+30
  %v32 = vld [vmem:[%s6] sm:$0x1]
  %v33 = vld [vmem:[%s1] sm:$0xff]
  %v34 = vld [vmem:[%s1 + $0x8] sm:$0xff]
  %v35 = vld [vmem:[%s3] sm:$0xff]
  %v36 = vld [vmem:[%s3 + $0x8] sm:$0xff]
  %v37 = vld [vmem:[%s3 + $0x10] sm:$0xff]
  %v38 = vld [vmem:[%s3 + $0x18] sm:$0xff]
  %v39 = vld [vmem:[%s3 + $0x20] sm:$0xff]
  %v40 = vld [vmem:[%s3 + $0x28] sm:$0xff]
  %v41 = vld [vmem:[%s3 + $0x30] sm:$0xff]
  %v42 = vld [vmem:[%s3 + $0x38] sm:$0xff]
  %v43 = vld [vmem:[%s3 + $0x40] sm:$0xff]
  %v44 = vld [vmem:[%s3 + $0x48] sm:$0xff]
  %v45 = vld [vmem:[%s3 + $0x50] sm:$0xff]
  %v46 = vld [vmem:[%s3 + $0x58] sm:$0xff]
  %v47 = vld [vmem:[%s3 + $0x60] sm:$0xff]
  %v48 = vld [vmem:[%s3 + $0x68] sm:$0xff]
  %v49 = vld [vmem:[%s3 + $0x70] sm:$0xff]
  %v50 = vld [vmem:[%s3 + $0x78] sm:$0xff]
  %51 = vmatprep.subr.mxu0 0.0
  %52 = vmatpush1.msra.mxu0 %v35
  %53 = vmatprep.subr.mxu0 0.0
  %54 = vmatpush1.msra.mxu0 %v36
  %55 = vmatprep.subr.mxu0 0.0
  %56 = vmatpush1.msra.mxu0 %v37
  %57 = vmatprep.subr.mxu0 0.0
  %58 = vmatpush1.msra.mxu0 %v38
  %59 = vmatprep.subr.mxu0 0.0
  %60 = vmatpush1.msra.mxu0 %v39
  %61 = vmatprep.subr.mxu0 0.0
  %62 = vmatpush1.msra.mxu0 %v40
  %63 = vmatprep.subr.mxu0 0.0
  %64 = vmatpush1.msra.mxu0 %v41
  %65 = vmatprep.subr.mxu0 0.0
  %66 = vmatpush1.msra.mxu0 %v42
  %67 = vmatprep.subr.mxu0 0.0
  %68 = vmatpush1.msra.mxu0 %v43
  %69 = vmatprep.subr.mxu0 0.0
  %70 = vmatpush1.msra.mxu0 %v44
  %71 = vmatprep.subr.mxu0 0.0
  %72 = vmatpush1.msra.mxu0 %v45
  %73 = vmatprep.subr.mxu0 0.0
  %74 = vmatpush1.msra.mxu0 %v46
  %75 = vmatprep.subr.mxu0 0.0
  %76 = vmatpush1.msra.mxu0 %v47
  %77 = vmatprep.subr.mxu0 0.0
  %78 = vmatpush1.msra.mxu0 %v48
  %79 = vmatprep.subr.mxu0 0.0
  %80 = vmatpush1.msra.mxu0 %v49
  %81 = vmatprep.subr.mxu0 0.0
  %82 = vmatpush1.msra.mxu0 %v50
  %83 = vmatprep.subr.mxu0 0.0
  %84 = vmatpush1.msra.mxu0 0.0
  %85 = vmatprep.subr.mxu0 0.0
  %86 = vmatpush1.msra.mxu0 0.0
  %87 = vmatprep.subr.mxu0 0.0
  %88 = vmatpush1.msra.mxu0 0.0
  %89 = vmatprep.subr.mxu0 0.0
  %90 = vmatpush1.msra.mxu0 0.0
  %91 = vmatprep.subr.mxu0 0.0
  %92 = vmatpush1.msra.mxu0 0.0
  %93 = vmatprep.subr.mxu0 0.0
  %94 = vmatpush1.msra.mxu0 0.0
  %95 = vmatprep.subr.mxu0 0.0
  %96 = vmatpush1.msra.mxu0 0.0
  %97 = vmatprep.subr.mxu0 0.0
  %98 = vmatpush1.msra.mxu0 0.0
  %99 = vmatprep.subr.mxu0 0.0
  %100 = vmatpush1.msra.mxu0 0.0
  %101 = vmatprep.subr.mxu0 0.0
  %102 = vmatpush1.msra.mxu0 0.0
  %103 = vmatprep.subr.mxu0 0.0
  %104 = vmatpush1.msra.mxu0 0.0
  %105 = vmatprep.subr.mxu0 0.0
  %106 = vmatpush1.msra.mxu0 0.0
  %107 = vmatprep.subr.mxu0 0.0
  %108 = vmatpush1.msra.mxu0 0.0
  %109 = vmatprep.subr.mxu0 0.0
  %110 = vmatpush1.msra.mxu0 0.0
  %111 = vmatprep.subr.mxu0 0.0
  %112 = vmatpush1.msra.mxu0 0.0
  %113 = vmatprep.subr.mxu0 0.0
  %114 = vmatpush1.msra.mxu0 0.0
  %115 = vmatprep.mubr.f32.mxu0 0.0
  %116 = vmatmul.mubr.f32.gmra.mrb[0].mxu0 %v33
  %v117 = vpop.f32.mrb[0].mxu0
  %v118 = vadd.f32 0.0, %v117
  %v119 = vpop.f32.mrb[0].mxu0
  %120 = vmatprep.mubr.f32.mxu0 0.0
  %121 = vmatmul.mubr.f32.gmra.mrb[0].mxu0 %v34
  %v122 = vpop.f32.mrb[0].mxu0
  %v123 = vadd.f32 0.0, %v122
  %v124 = vpop.f32.mrb[0].mxu0
  %125 = vdwg.mxu0
  %v126 = vld [vmem:[%s0] sm:$0xff]
  %v127 = vld [vmem:[%s0 + $0x8] sm:$0xff]
  %v128 = vld [vmem:[%s4] sm:$0xff]
  %vm129 = vcmask 64512
  %v131 = vsel %vm129, %v126, 0
  %v134 = vsel %vm129, %v127, 0
  %136 = vmatprep.subr.mxu0 0.0
  %137 = vmatpush1.msra.mxu0 %v128
  %138 = vmatprep.subr.mxu0 0.0
  %139 = vmatpush1.msra.mxu0 0.0
  %140 = vmatprep.subr.mxu0 0.0
  %141 = vmatpush1.msra.mxu0 0.0
  %142 = vmatprep.subr.mxu0 0.0
  %143 = vmatpush1.msra.mxu0 0.0
  %144 = vmatprep.subr.mxu0 0.0
  %145 = vmatpush1.msra.mxu0 0.0
  %146 = vmatprep.subr.mxu0 0.0
  %147 = vmatpush1.msra.mxu0 0.0
  %148 = vmatprep.subr.mxu0 0.0
  %149 = vmatpush1.msra.mxu0 0.0
  %150 = vmatprep.subr.mxu0 0.0
  %151 = vmatpush1.msra.mxu0 0.0
  %152 = vmatprep.subr.mxu0 0.0
  %153 = vmatpush1.msra.mxu0 0.0
  %154 = vmatprep.subr.mxu0 0.0
  %155 = vmatpush1.msra.mxu0 0.0
  %156 = vmatprep.subr.mxu0 0.0
  %157 = vmatpush1.msra.mxu0 0.0
  %158 = vmatprep.subr.mxu0 0.0
  %159 = vmatpush1.msra.mxu0 0.0
  %160 = vmatprep.subr.mxu0 0.0
  %161 = vmatpush1.msra.mxu0 0.0
  %162 = vmatprep.subr.mxu0 0.0
  %163 = vmatpush1.msra.mxu0 0.0
  %164 = vmatprep.subr.mxu0 0.0
  %165 = vmatpush1.msra.mxu0 0.0
  %166 = vmatprep.subr.mxu0 0.0
  %167 = vmatpush1.msra.mxu0 0.0
  %168 = vmatprep.subr.mxu0 0.0
  %169 = vmatpush1.msra.mxu0 0.0
  %170 = vmatprep.subr.mxu0 0.0
  %171 = vmatpush1.msra.mxu0 0.0
  %172 = vmatprep.subr.mxu0 0.0
  %173 = vmatpush1.msra.mxu0 0.0
  %174 = vmatprep.subr.mxu0 0.0
  %175 = vmatpush1.msra.mxu0 0.0
  %176 = vmatprep.subr.mxu0 0.0
  %177 = vmatpush1.msra.mxu0 0.0
  %178 = vmatprep.subr.mxu0 0.0
  %179 = vmatpush1.msra.mxu0 0.0
  %180 = vmatprep.subr.mxu0 0.0
  %181 = vmatpush1.msra.mxu0 0.0
  %182 = vmatprep.subr.mxu0 0.0
  %183 = vmatpush1.msra.mxu0 0.0
  %184 = vmatprep.subr.mxu0 0.0
  %185 = vmatpush1.msra.mxu0 0.0
  %186 = vmatprep.subr.mxu0 0.0
  %187 = vmatpush1.msra.mxu0 0.0
  %188 = vmatprep.subr.mxu0 0.0
  %189 = vmatpush1.msra.mxu0 0.0
  %190 = vmatprep.subr.mxu0 0.0
  %191 = vmatpush1.msra.mxu0 0.0
  %192 = vmatprep.subr.mxu0 0.0
  %193 = vmatpush1.msra.mxu0 0.0
  %194 = vmatprep.subr.mxu0 0.0
  %195 = vmatpush1.msra.mxu0 0.0
  %196 = vmatprep.subr.mxu0 0.0
  %197 = vmatpush1.msra.mxu0 0.0
  %198 = vmatprep.subr.mxu0 0.0
  %199 = vmatpush1.msra.mxu0 0.0
  %200 = vmatprep.mubr.f32.mxu0 0.0
  %201 = vmatmul.mubr.f32.gmra.mrb[0].mxu0 %v131
  %v202 = vpop.f32.mrb[0].mxu0
  %v203 = vadd.f32 0.0, %v202
  %v204 = vpop.f32.mrb[0].mxu0
  %205 = vmatprep.mubr.f32.mxu0 0.0
  %206 = vmatmul.mubr.f32.gmra.mrb[0].mxu0 %v134
  %v207 = vpop.f32.mrb[0].mxu0
  %v208 = vadd.f32 0.0, %v207
  %v209 = vpop.f32.mrb[0].mxu0
  %210 = vdwg.mxu0
  %213 = vrot.lane.b32.xlu0 %v203, 112
  %v214 = vpop.permute.xlu0 %213
  %215 = vrot.lane.b32.xlu0 %v208, 112
  %v216 = vpop.permute.xlu0 %215
  %219 = vxpose.xlu0.b32.start [1/16] %v214, 128
  %220 = vxpose.xlu0.b32.cont [2/16] %v216, 128
  %221 = vxpose.xlu0.b32.cont [3/16] 0.0, 128
  %222 = vxpose.xlu0.b32.cont [4/16] 0.0, 128
  %223 = vxpose.xlu0.b32.cont [5/16] 0.0, 128
  %224 = vxpose.xlu0.b32.cont [6/16] 0.0, 128
  %225 = vxpose.xlu0.b32.cont [7/16] 0.0, 128
  %226 = vxpose.xlu0.b32.cont [8/16] 0.0, 128
  %227 = vxpose.xlu0.b32.cont [9/16] 0.0, 128
  %228 = vxpose.xlu0.b32.cont [10/16] 0.0, 128
  %229 = vxpose.xlu0.b32.cont [11/16] 0.0, 128
  %230 = vxpose.xlu0.b32.cont [12/16] 0.0, 128
  %231 = vxpose.xlu0.b32.cont [13/16] 0.0, 128
  %232 = vxpose.xlu0.b32.cont [14/16] 0.0, 128
  %233 = vxpose.xlu0.b32.cont [15/16] 0.0, 128
  %234 = vxpose.xlu0.b32.end [16/16] 0.0, 128
  %v235 = vpop.trf.xlu0
  %v236 = vpop.trf.xlu0
  %v237 = vpop.trf.xlu0
  %v238 = vpop.trf.xlu0
  %v239 = vpop.trf.xlu0
  %v240 = vpop.trf.xlu0
  %v241 = vpop.trf.xlu0
  %v242 = vpop.trf.xlu0
  %v243 = vpop.trf.xlu0
  %v244 = vpop.trf.xlu0
  %v245 = vpop.trf.xlu0
  %v246 = vpop.trf.xlu0
  %v247 = vpop.trf.xlu0
  %v248 = vpop.trf.xlu0
  %v249 = vpop.trf.xlu0
  %v250 = vpop.trf.xlu0
  %v251 = vlaneseq
  %v252 = vshrl.u32 %v251, 7
  %v253 = vsub.s32 0, %v252
  %v254 = vrot.slane %v235, %v253
  %v255 = vadd.f32 %v254, %v118
  %v256 = vadd.f32 %v254, %v123
  %257 = vset.pattern.permute.xlu0 18
  %258 = vperm.xlu0 %257, %v203
  %v259 = vpop.permute.xlu0 %258
  %261 = vset.pattern.permute.xlu0 18
  %262 = vperm.xlu0 %261, %v208
  %v263 = vpop.permute.xlu0 %262
  %v265 = vadd.f32 %v255, %v259
  %v266 = vadd.f32 %v256, %v263
  %vm267 = vcmp.ge.f32.partialorder %v265, 0.0
  %vm268 = vcmp.ge.f32.partialorder %v266, 0.0
  %v269 = vmul.f32 %v265, 0.2
  %v270 = vmul.f32 %v266, 0.2
  %v271 = vsel %vm267, %v265, %v269
  %v272 = vsel %vm268, %v266, %v270
  %v273 = vadd.f32 %v271, %v30
  %v274 = vadd.f32 %v272, %v31
  %vm275 = vcmask 130048
  %v276 = vsel %vm275, %v273, -inf
  %277 = vmax.xlane.f32.xlu0 %v276
  %v278 = vpop.xlane.xlu0 %277
  %v279 = vsel %vm275, %v274, -inf
  %280 = vmax.xlane.f32.xlu0 %v279
  %v281 = vpop.xlane.xlu0 %280
  %v282 = vsub.f32 %v273, %v278
  %v283 = vsub.f32 %v274, %v281
  %v284 = vmul.f32 %v282, 1.442695
  %v285 = vpow.pop %v284
  %v286 = vmul.f32 %v283, 1.442695
  %v287 = vpow.pop %v286
  %v288 = vmul.f32 %v285, %v26
  %v289 = vmul.f32 %v287, %v27
  %v290 = vsel %vm275, %v288, 0.0
  %291 = vadd.xlane.f32.xlu0 %v290
  %v292 = vpop.xlane.xlu0 %291
  %v293 = vsel %vm275, %v289, 0.0
  %294 = vadd.xlane.f32.xlu0 %v293
  %v295 = vpop.xlane.xlu0 %294
  %v296 = vrcp.pop %v292
  %v297 = vrcp.pop %v295
  %v298 = vmul.f32 %v288, %v296
  %v299 = vmul.f32 %v289, %v297
  %v301 = vsel %vm275, %v298, 0
  %v304 = vsel %vm275, %v299, 0
  %306 = vmatprep.subr.mxu0 0.0
  %307 = vmatpush1.msra.mxu0 %v203
  %308 = vmatprep.subr.mxu0 0.0
  %309 = vmatpush1.msra.mxu0 %v208
  %310 = vmatprep.subr.mxu0 0.0
  %311 = vmatpush1.msra.mxu0 0.0
  %312 = vmatprep.subr.mxu0 0.0
  %313 = vmatpush1.msra.mxu0 0.0
  %314 = vmatprep.subr.mxu0 0.0
  %315 = vmatpush1.msra.mxu0 0.0
  %316 = vmatprep.subr.mxu0 0.0
  %317 = vmatpush1.msra.mxu0 0.0
  %318 = vmatprep.subr.mxu0 0.0
  %319 = vmatpush1.msra.mxu0 0.0
  %320 = vmatprep.subr.mxu0 0.0
  %321 = vmatpush1.msra.mxu0 0.0
  %322 = vmatprep.subr.mxu0 0.0
  %323 = vmatpush1.msra.mxu0 0.0
  %324 = vmatprep.subr.mxu0 0.0
  %325 = vmatpush1.msra.mxu0 0.0
  %326 = vmatprep.subr.mxu0 0.0
  %327 = vmatpush1.msra.mxu0 0.0
  %328 = vmatprep.subr.mxu0 0.0
  %329 = vmatpush1.msra.mxu0 0.0
  %330 = vmatprep.subr.mxu0 0.0
  %331 = vmatpush1.msra.mxu0 0.0
  %332 = vmatprep.subr.mxu0 0.0
  %333 = vmatpush1.msra.mxu0 0.0
  %334 = vmatprep.subr.mxu0 0.0
  %335 = vmatpush1.msra.mxu0 0.0
  %336 = vmatprep.subr.mxu0 0.0
  %337 = vmatpush1.msra.mxu0 0.0
  %338 = vmatprep.subr.mxu0 0.0
  %339 = vmatpush1.msra.mxu0 0.0
  %340 = vmatprep.subr.mxu0 0.0
  %341 = vmatpush1.msra.mxu0 0.0
  %342 = vmatprep.subr.mxu0 0.0
  %343 = vmatpush1.msra.mxu0 0.0
  %344 = vmatprep.subr.mxu0 0.0
  %345 = vmatpush1.msra.mxu0 0.0
  %346 = vmatprep.subr.mxu0 0.0
  %347 = vmatpush1.msra.mxu0 0.0
  %348 = vmatprep.subr.mxu0 0.0
  %349 = vmatpush1.msra.mxu0 0.0
  %350 = vmatprep.subr.mxu0 0.0
  %351 = vmatpush1.msra.mxu0 0.0
  %352 = vmatprep.subr.mxu0 0.0
  %353 = vmatpush1.msra.mxu0 0.0
  %354 = vmatprep.subr.mxu0 0.0
  %355 = vmatpush1.msra.mxu0 0.0
  %356 = vmatprep.subr.mxu0 0.0
  %357 = vmatpush1.msra.mxu0 0.0
  %358 = vmatprep.subr.mxu0 0.0
  %359 = vmatpush1.msra.mxu0 0.0
  %360 = vmatprep.subr.mxu0 0.0
  %361 = vmatpush1.msra.mxu0 0.0
  %362 = vmatprep.subr.mxu0 0.0
  %363 = vmatpush1.msra.mxu0 0.0
  %364 = vmatprep.subr.mxu0 0.0
  %365 = vmatpush1.msra.mxu0 0.0
  %366 = vmatprep.subr.mxu0 0.0
  %367 = vmatpush1.msra.mxu0 0.0
  %368 = vmatprep.subr.mxu0 0.0
  %369 = vmatpush1.msra.mxu0 0.0
  %370 = vmatprep.mubr.f32.mxu0 0.0
  %371 = vmatmul.mubr.f32.gmra.mrb[0].mxu0 %v301
  %v372 = vpop.f32.mrb[0].mxu0
  %v373 = vadd.f32 0.0, %v372
  %v374 = vpop.f32.mrb[0].mxu0
  %375 = vmatprep.mubr.f32.mxu0 0.0
  %376 = vmatmul.mubr.f32.gmra.mrb[0].mxu0 %v304
  %v377 = vpop.f32.mrb[0].mxu0
  %v378 = vadd.f32 0.0, %v377
  %v379 = vpop.f32.mrb[0].mxu0
  %380 = vdwg.mxu0
  %381 = vrot.lane.b32.xlu0 %v203, 111
  %v382 = vpop.permute.xlu0 %381
  %383 = vrot.lane.b32.xlu0 %v208, 111
  %v384 = vpop.permute.xlu0 %383
  %387 = vxpose.xlu0.b32.start [1/16] %v382, 128
  %388 = vxpose.xlu0.b32.cont [2/16] %v384, 128
  %389 = vxpose.xlu0.b32.cont [3/16] 0.0, 128
  %390 = vxpose.xlu0.b32.cont [4/16] 0.0, 128
  %391 = vxpose.xlu0.b32.cont [5/16] 0.0, 128
  %392 = vxpose.xlu0.b32.cont [6/16] 0.0, 128
  %393 = vxpose.xlu0.b32.cont [7/16] 0.0, 128
  %394 = vxpose.xlu0.b32.cont [8/16] 0.0, 128
  %395 = vxpose.xlu0.b32.cont [9/16] 0.0, 128
  %396 = vxpose.xlu0.b32.cont [10/16] 0.0, 128
  %397 = vxpose.xlu0.b32.cont [11/16] 0.0, 128
  %398 = vxpose.xlu0.b32.cont [12/16] 0.0, 128
  %399 = vxpose.xlu0.b32.cont [13/16] 0.0, 128
  %400 = vxpose.xlu0.b32.cont [14/16] 0.0, 128
  %401 = vxpose.xlu0.b32.cont [15/16] 0.0, 128
  %402 = vxpose.xlu0.b32.end [16/16] 0.0, 128
  %v403 = vpop.trf.xlu0
  %v404 = vpop.trf.xlu0
  %v405 = vpop.trf.xlu0
  %v406 = vpop.trf.xlu0
  %v407 = vpop.trf.xlu0
  %v408 = vpop.trf.xlu0
  %v409 = vpop.trf.xlu0
  %v410 = vpop.trf.xlu0
  %v411 = vpop.trf.xlu0
  %v412 = vpop.trf.xlu0
  %v413 = vpop.trf.xlu0
  %v414 = vpop.trf.xlu0
  %v415 = vpop.trf.xlu0
  %v416 = vpop.trf.xlu0
  %v417 = vpop.trf.xlu0
  %v418 = vpop.trf.xlu0
  %v419 = vlaneseq
  %v420 = vshrl.u32 %v419, 7
  %v421 = vsub.s32 0, %v420
  %v422 = vrot.slane %v403, %v421
  %425 = vrot.lane.b32.xlu0 %v118, 112
  %v426 = vpop.permute.xlu0 %425
  %427 = vrot.lane.b32.xlu0 %v123, 112
  %v428 = vpop.permute.xlu0 %427
  %v431 = vadd.f32 %v422, %v426
  %v432 = vadd.f32 %v422, %v428
  %433 = vset.pattern.permute.xlu0 19
  %434 = vperm.xlu0 %433, %v203
  %v435 = vpop.permute.xlu0 %434
  %437 = vset.pattern.permute.xlu0 19
  %438 = vperm.xlu0 %437, %v208
  %v439 = vpop.permute.xlu0 %438
  %v441 = vadd.f32 %v431, %v435
  %v442 = vadd.f32 %v432, %v439
  %vm443 = vcmp.ge.f32.partialorder %v441, 0.0
  %vm444 = vcmp.ge.f32.partialorder %v442, 0.0
  %v445 = vmul.f32 %v441, 0.2
  %v446 = vmul.f32 %v442, 0.2
  %v447 = vsel %vm443, %v441, %v445
  %v448 = vsel %vm444, %v442, %v446
  %v449 = vadd.f32 %v447, %v30
  %v450 = vadd.f32 %v448, %v31
  %v451 = vsel %vm275, %v449, -inf
  %452 = vmax.xlane.f32.xlu0 %v451
  %v453 = vpop.xlane.xlu0 %452
  %v454 = vsel %vm275, %v450, -inf
  %455 = vmax.xlane.f32.xlu0 %v454
  %v456 = vpop.xlane.xlu0 %455
  %v457 = vsub.f32 %v449, %v453
  %v458 = vsub.f32 %v450, %v456
  %v459 = vmul.f32 %v457, 1.442695
  %v460 = vpow.pop %v459
  %v461 = vmul.f32 %v458, 1.442695
  %v462 = vpow.pop %v461
  %v463 = vmul.f32 %v460, %v26
  %v464 = vmul.f32 %v462, %v27
  %v465 = vsel %vm275, %v463, 0.0
  %466 = vadd.xlane.f32.xlu0 %v465
  %v467 = vpop.xlane.xlu0 %466
  %v468 = vsel %vm275, %v464, 0.0
  %469 = vadd.xlane.f32.xlu0 %v468
  %v470 = vpop.xlane.xlu0 %469
  %v471 = vrcp.pop %v467
  %v472 = vrcp.pop %v470
  %v473 = vmul.f32 %v463, %v471
  %v474 = vmul.f32 %v464, %v472
  %475 = vrot.lane.b32.xlu0 %v203, 120
  %v476 = vpop.permute.xlu0 %475
  %477 = vrot.lane.b32.xlu0 %v208, 120
  %v478 = vpop.permute.xlu0 %477
  %v482 = vsel %vm275, %v473, 0
  %v485 = vsel %vm275, %v474, 0
  %487 = vmatprep.subr.mxu0 0.0
  %488 = vmatpush1.msra.mxu0 %v476
  %489 = vmatprep.subr.mxu0 0.0
  %490 = vmatpush1.msra.mxu0 %v478
  %491 = vmatprep.subr.mxu0 0.0
  %492 = vmatpush1.msra.mxu0 0.0
  %493 = vmatprep.subr.mxu0 0.0
  %494 = vmatpush1.msra.mxu0 0.0
  %495 = vmatprep.subr.mxu0 0.0
  %496 = vmatpush1.msra.mxu0 0.0
  %497 = vmatprep.subr.mxu0 0.0
  %498 = vmatpush1.msra.mxu0 0.0
  %499 = vmatprep.subr.mxu0 0.0
  %500 = vmatpush1.msra.mxu0 0.0
  %501 = vmatprep.subr.mxu0 0.0
  %502 = vmatpush1.msra.mxu0 0.0
  %503 = vmatprep.subr.mxu0 0.0
  %504 = vmatpush1.msra.mxu0 0.0
  %505 = vmatprep.subr.mxu0 0.0
  %506 = vmatpush1.msra.mxu0 0.0
  %507 = vmatprep.subr.mxu0 0.0
  %508 = vmatpush1.msra.mxu0 0.0
  %509 = vmatprep.subr.mxu0 0.0
  %510 = vmatpush1.msra.mxu0 0.0
  %511 = vmatprep.subr.mxu0 0.0
  %512 = vmatpush1.msra.mxu0 0.0
  %513 = vmatprep.subr.mxu0 0.0
  %514 = vmatpush1.msra.mxu0 0.0
  %515 = vmatprep.subr.mxu0 0.0
  %516 = vmatpush1.msra.mxu0 0.0
  %517 = vmatprep.subr.mxu0 0.0
  %518 = vmatpush1.msra.mxu0 0.0
  %519 = vmatprep.subr.mxu0 0.0
  %520 = vmatpush1.msra.mxu0 0.0
  %521 = vmatprep.subr.mxu0 0.0
  %522 = vmatpush1.msra.mxu0 0.0
  %523 = vmatprep.subr.mxu0 0.0
  %524 = vmatpush1.msra.mxu0 0.0
  %525 = vmatprep.subr.mxu0 0.0
  %526 = vmatpush1.msra.mxu0 0.0
  %527 = vmatprep.subr.mxu0 0.0
  %528 = vmatpush1.msra.mxu0 0.0
  %529 = vmatprep.subr.mxu0 0.0
  %530 = vmatpush1.msra.mxu0 0.0
  %531 = vmatprep.subr.mxu0 0.0
  %532 = vmatpush1.msra.mxu0 0.0
  %533 = vmatprep.subr.mxu0 0.0
  %534 = vmatpush1.msra.mxu0 0.0
  %535 = vmatprep.subr.mxu0 0.0
  %536 = vmatpush1.msra.mxu0 0.0
  %537 = vmatprep.subr.mxu0 0.0
  %538 = vmatpush1.msra.mxu0 0.0
  %539 = vmatprep.subr.mxu0 0.0
  %540 = vmatpush1.msra.mxu0 0.0
  %541 = vmatprep.subr.mxu0 0.0
  %542 = vmatpush1.msra.mxu0 0.0
  %543 = vmatprep.subr.mxu0 0.0
  %544 = vmatpush1.msra.mxu0 0.0
  %545 = vmatprep.subr.mxu0 0.0
  %546 = vmatpush1.msra.mxu0 0.0
  %547 = vmatprep.subr.mxu0 0.0
  %548 = vmatpush1.msra.mxu0 0.0
  %549 = vmatprep.subr.mxu0 0.0
  %550 = vmatpush1.msra.mxu0 0.0
  %551 = vmatprep.mubr.f32.mxu0 0.0
  %552 = vmatmul.mubr.f32.gmra.mrb[0].mxu0 %v482
  %v553 = vpop.f32.mrb[0].mxu0
  %v554 = vadd.f32 0.0, %v553
  %v555 = vpop.f32.mrb[0].mxu0
  %556 = vmatprep.mubr.f32.mxu0 0.0
  %557 = vmatmul.mubr.f32.gmra.mrb[0].mxu0 %v485
  %v558 = vpop.f32.mrb[0].mxu0
  %v559 = vadd.f32 0.0, %v558
  %v560 = vpop.f32.mrb[0].mxu0
  %561 = vdwg.mxu0
  %564 = vrot.lane.b32.xlu0 %v554, 8
  %v565 = vpop.permute.xlu0 %564
  %566 = vrot.lane.b32.xlu0 %v559, 8
  %v567 = vpop.permute.xlu0 %566
  %v570 = vsel %vm129, %v373, %v565
  %v571 = vsel %vm129, %v378, %v567
  %v573 = vlaneseq
  %v574 = vshrl.u32 %v573, 7
  %v575 = vsub.s32 0, %v574
  %v576 = vrot.slane %v32, %v575
  %v578 = vadd.f32 %v570, %v576
  %v579 = vadd.f32 %v571, %v576
  %v580 = vmax.f32 %v578, 0.0
  %v581 = vmax.f32 %v579, 0.0
  %v582 = vld [vmem:[%s5] sm:$0xff]
  %v583 = vld [vmem:[%s5 + $0x8] sm:$0xff]
  %v585 = vsel %vm275, %v580, 0
  %v588 = vsel %vm275, %v581, 0
  %590 = vmatprep.subr.mxu0 0.0
  %591 = vmatpush1.msra.mxu0 %v582
  %592 = vmatprep.subr.mxu0 0.0
  %593 = vmatpush1.msra.mxu0 %v583
  %594 = vmatprep.subr.mxu0 0.0
  %595 = vmatpush1.msra.mxu0 0.0
  %596 = vmatprep.subr.mxu0 0.0
  %597 = vmatpush1.msra.mxu0 0.0
  %598 = vmatprep.subr.mxu0 0.0
  %599 = vmatpush1.msra.mxu0 0.0
  %600 = vmatprep.subr.mxu0 0.0
  %601 = vmatpush1.msra.mxu0 0.0
  %602 = vmatprep.subr.mxu0 0.0
  %603 = vmatpush1.msra.mxu0 0.0
  %604 = vmatprep.subr.mxu0 0.0
  %605 = vmatpush1.msra.mxu0 0.0
  %606 = vmatprep.subr.mxu0 0.0
  %607 = vmatpush1.msra.mxu0 0.0
  %608 = vmatprep.subr.mxu0 0.0
  %609 = vmatpush1.msra.mxu0 0.0
  %610 = vmatprep.subr.mxu0 0.0
  %611 = vmatpush1.msra.mxu0 0.0
  %612 = vmatprep.subr.mxu0 0.0
  %613 = vmatpush1.msra.mxu0 0.0
  %614 = vmatprep.subr.mxu0 0.0
  %615 = vmatpush1.msra.mxu0 0.0
  %616 = vmatprep.subr.mxu0 0.0
  %617 = vmatpush1.msra.mxu0 0.0
  %618 = vmatprep.subr.mxu0 0.0
  %619 = vmatpush1.msra.mxu0 0.0
  %620 = vmatprep.subr.mxu0 0.0
  %621 = vmatpush1.msra.mxu0 0.0
  %622 = vmatprep.subr.mxu0 0.0
  %623 = vmatpush1.msra.mxu0 0.0
  %624 = vmatprep.subr.mxu0 0.0
  %625 = vmatpush1.msra.mxu0 0.0
  %626 = vmatprep.subr.mxu0 0.0
  %627 = vmatpush1.msra.mxu0 0.0
  %628 = vmatprep.subr.mxu0 0.0
  %629 = vmatpush1.msra.mxu0 0.0
  %630 = vmatprep.subr.mxu0 0.0
  %631 = vmatpush1.msra.mxu0 0.0
  %632 = vmatprep.subr.mxu0 0.0
  %633 = vmatpush1.msra.mxu0 0.0
  %634 = vmatprep.subr.mxu0 0.0
  %635 = vmatpush1.msra.mxu0 0.0
  %636 = vmatprep.subr.mxu0 0.0
  %637 = vmatpush1.msra.mxu0 0.0
  %638 = vmatprep.subr.mxu0 0.0
  %639 = vmatpush1.msra.mxu0 0.0
  %640 = vmatprep.subr.mxu0 0.0
  %641 = vmatpush1.msra.mxu0 0.0
  %642 = vmatprep.subr.mxu0 0.0
  %643 = vmatpush1.msra.mxu0 0.0
  %644 = vmatprep.subr.mxu0 0.0
  %645 = vmatpush1.msra.mxu0 0.0
  %646 = vmatprep.subr.mxu0 0.0
  %647 = vmatpush1.msra.mxu0 0.0
  %648 = vmatprep.subr.mxu0 0.0
  %649 = vmatpush1.msra.mxu0 0.0
  %650 = vmatprep.subr.mxu0 0.0
  %651 = vmatpush1.msra.mxu0 0.0
  %652 = vmatprep.subr.mxu0 0.0
  %653 = vmatpush1.msra.mxu0 0.0
  %654 = vmatprep.mubr.f32.mxu0 0.0
  %655 = vmatmul.mubr.f32.gmra.mrb[0].mxu0 %v585
  %v656 = vpop.f32.mrb[0].mxu0
  %v657 = vadd.f32 0.0, %v656
  %v658 = vpop.f32.mrb[0].mxu0
  %659 = vmatprep.mubr.f32.mxu0 0.0
  %660 = vmatmul.mubr.f32.gmra.mrb[0].mxu0 %v588
  %v661 = vpop.f32.mrb[0].mxu0
  %v662 = vadd.f32 0.0, %v661
  %v663 = vpop.f32.mrb[0].mxu0
  %664 = vdwg.mxu0
  %667 = vrot.lane.b32.xlu0 %v657, 120
  %v668 = vpop.permute.xlu0 %667
  %669 = vrot.lane.b32.xlu0 %v662, 120
  %v670 = vpop.permute.xlu0 %669
  %673 = vxpose.xlu0.b32.start [1/16] %v668, 128
  %674 = vxpose.xlu0.b32.cont [2/16] %v670, 128
  %675 = vxpose.xlu0.b32.cont [3/16] 0.0, 128
  %676 = vxpose.xlu0.b32.cont [4/16] 0.0, 128
  %677 = vxpose.xlu0.b32.cont [5/16] 0.0, 128
  %678 = vxpose.xlu0.b32.cont [6/16] 0.0, 128
  %679 = vxpose.xlu0.b32.cont [7/16] 0.0, 128
  %680 = vxpose.xlu0.b32.cont [8/16] 0.0, 128
  %681 = vxpose.xlu0.b32.cont [9/16] 0.0, 128
  %682 = vxpose.xlu0.b32.cont [10/16] 0.0, 128
  %683 = vxpose.xlu0.b32.cont [11/16] 0.0, 128
  %684 = vxpose.xlu0.b32.cont [12/16] 0.0, 128
  %685 = vxpose.xlu0.b32.cont [13/16] 0.0, 128
  %686 = vxpose.xlu0.b32.cont [14/16] 0.0, 128
  %687 = vxpose.xlu0.b32.cont [15/16] 0.0, 128
  %688 = vxpose.xlu0.b32.end [16/16] 0.0, 128
  %v689 = vpop.trf.xlu0
  %v690 = vpop.trf.xlu0
  %v691 = vpop.trf.xlu0
  %v692 = vpop.trf.xlu0
  %v693 = vpop.trf.xlu0
  %v694 = vpop.trf.xlu0
  %v695 = vpop.trf.xlu0
  %v696 = vpop.trf.xlu0
  %v697 = vpop.trf.xlu0
  %v698 = vpop.trf.xlu0
  %v699 = vpop.trf.xlu0
  %v700 = vpop.trf.xlu0
  %v701 = vpop.trf.xlu0
  %v702 = vpop.trf.xlu0
  %v703 = vpop.trf.xlu0
  %v704 = vpop.trf.xlu0
  %v705 = vlaneseq
  %v706 = vshrl.u32 %v705, 7
  %v707 = vsub.s32 0, %v706
  %v708 = vrot.slane %v689, %v707
  %709 = vrot.lane.b32.xlu0 %v118, 96
  %v710 = vpop.permute.xlu0 %709
  %711 = vrot.lane.b32.xlu0 %v123, 96
  %v712 = vpop.permute.xlu0 %711
  %v715 = vadd.f32 %v708, %v710
  %v716 = vadd.f32 %v708, %v712
  %717 = vset.pattern.permute.xlu0 9
  %718 = vperm.xlu0 %717, %v657
  %v719 = vpop.permute.xlu0 %718
  %721 = vset.pattern.permute.xlu0 9
  %722 = vperm.xlu0 %721, %v662
  %v723 = vpop.permute.xlu0 %722
  %v725 = vadd.f32 %v715, %v719
  %v726 = vadd.f32 %v716, %v723
  %vm727 = vcmp.ge.f32.partialorder %v725, 0.0
  %vm728 = vcmp.ge.f32.partialorder %v726, 0.0
  %v729 = vmul.f32 %v725, 0.2
  %v730 = vmul.f32 %v726, 0.2
  %v731 = vsel %vm727, %v725, %v729
  %v732 = vsel %vm728, %v726, %v730
  %v733 = vadd.f32 %v731, %v30
  %v734 = vadd.f32 %v732, %v31
  %v735 = vsel %vm275, %v733, -inf
  %736 = vmax.xlane.f32.xlu0 %v735
  %v737 = vpop.xlane.xlu0 %736
  %v738 = vsel %vm275, %v734, -inf
  %739 = vmax.xlane.f32.xlu0 %v738
  %v740 = vpop.xlane.xlu0 %739
  %v741 = vsub.f32 %v733, %v737
  %v742 = vsub.f32 %v734, %v740
  %v743 = vmul.f32 %v741, 1.442695
  %v744 = vpow.pop %v743
  %v745 = vmul.f32 %v742, 1.442695
  %v746 = vpow.pop %v745
  %v747 = vmul.f32 %v744, %v26
  %v748 = vmul.f32 %v746, %v27
  %v749 = vsel %vm275, %v747, 0.0
  %750 = vadd.xlane.f32.xlu0 %v749
  %v751 = vpop.xlane.xlu0 %750
  %v752 = vsel %vm275, %v748, 0.0
  %753 = vadd.xlane.f32.xlu0 %v752
  %v754 = vpop.xlane.xlu0 %753
  %v755 = vrcp.pop %v751
  %v756 = vrcp.pop %v754
  %v757 = vmul.f32 %v747, %v755
  %v758 = vmul.f32 %v748, %v756
  %759 = vrot.lane.b32.xlu0 %v576, 112
  %v760 = vpop.permute.xlu0 %759
  %v763 = vsel %vm275, %v757, 0
  %v766 = vsel %vm275, %v758, 0
  %768 = vmatprep.subr.mxu0 0.0
  %769 = vmatpush1.msra.mxu0 %v657
  %770 = vmatprep.subr.mxu0 0.0
  %771 = vmatpush1.msra.mxu0 %v662
  %772 = vmatprep.subr.mxu0 0.0
  %773 = vmatpush1.msra.mxu0 0.0
  %774 = vmatprep.subr.mxu0 0.0
  %775 = vmatpush1.msra.mxu0 0.0
  %776 = vmatprep.subr.mxu0 0.0
  %777 = vmatpush1.msra.mxu0 0.0
  %778 = vmatprep.subr.mxu0 0.0
  %779 = vmatpush1.msra.mxu0 0.0
  %780 = vmatprep.subr.mxu0 0.0
  %781 = vmatpush1.msra.mxu0 0.0
  %782 = vmatprep.subr.mxu0 0.0
  %783 = vmatpush1.msra.mxu0 0.0
  %784 = vmatprep.subr.mxu0 0.0
  %785 = vmatpush1.msra.mxu0 0.0
  %786 = vmatprep.subr.mxu0 0.0
  %787 = vmatpush1.msra.mxu0 0.0
  %788 = vmatprep.subr.mxu0 0.0
  %789 = vmatpush1.msra.mxu0 0.0
  %790 = vmatprep.subr.mxu0 0.0
  %791 = vmatpush1.msra.mxu0 0.0
  %792 = vmatprep.subr.mxu0 0.0
  %793 = vmatpush1.msra.mxu0 0.0
  %794 = vmatprep.subr.mxu0 0.0
  %795 = vmatpush1.msra.mxu0 0.0
  %796 = vmatprep.subr.mxu0 0.0
  %797 = vmatpush1.msra.mxu0 0.0
  %798 = vmatprep.subr.mxu0 0.0
  %799 = vmatpush1.msra.mxu0 0.0
  %800 = vmatprep.subr.mxu0 0.0
  %801 = vmatpush1.msra.mxu0 0.0
  %802 = vmatprep.subr.mxu0 0.0
  %803 = vmatpush1.msra.mxu0 0.0
  %804 = vmatprep.subr.mxu0 0.0
  %805 = vmatpush1.msra.mxu0 0.0
  %806 = vmatprep.subr.mxu0 0.0
  %807 = vmatpush1.msra.mxu0 0.0
  %808 = vmatprep.subr.mxu0 0.0
  %809 = vmatpush1.msra.mxu0 0.0
  %810 = vmatprep.subr.mxu0 0.0
  %811 = vmatpush1.msra.mxu0 0.0
  %812 = vmatprep.subr.mxu0 0.0
  %813 = vmatpush1.msra.mxu0 0.0
  %814 = vmatprep.subr.mxu0 0.0
  %815 = vmatpush1.msra.mxu0 0.0
  %816 = vmatprep.subr.mxu0 0.0
  %817 = vmatpush1.msra.mxu0 0.0
  %818 = vmatprep.subr.mxu0 0.0
  %819 = vmatpush1.msra.mxu0 0.0
  %820 = vmatprep.subr.mxu0 0.0
  %821 = vmatpush1.msra.mxu0 0.0
  %822 = vmatprep.subr.mxu0 0.0
  %823 = vmatpush1.msra.mxu0 0.0
  %824 = vmatprep.subr.mxu0 0.0
  %825 = vmatpush1.msra.mxu0 0.0
  %826 = vmatprep.subr.mxu0 0.0
  %827 = vmatpush1.msra.mxu0 0.0
  %828 = vmatprep.subr.mxu0 0.0
  %829 = vmatpush1.msra.mxu0 0.0
  %830 = vmatprep.subr.mxu0 0.0
  %831 = vmatpush1.msra.mxu0 0.0
  %832 = vmatprep.mubr.f32.mxu0 0.0
  %833 = vmatmul.mubr.f32.gmra.mrb[0].mxu0 %v763
  %v834 = vpop.f32.mrb[0].mxu0
  %v835 = vadd.f32 %v760, %v834
  %v836 = vpop.f32.mrb[0].mxu0
  %837 = vmatprep.mubr.f32.mxu0 0.0
  %838 = vmatmul.mubr.f32.gmra.mrb[0].mxu0 %v766
  %v839 = vpop.f32.mrb[0].mxu0
  %v840 = vadd.f32 %v760, %v839
  %v841 = vpop.f32.mrb[0].mxu0
  %842 = vdwg.mxu0
  %843 = vst.msk [vmem:[%s7] sm:$0xff] %vm129, %v835
  %844 = vst.msk [vmem:[%s7 + $0x8] sm:$0xff] %vm129, %v840
  // Predicated region
  $region30: #{gat_forward.1} parent=0 // pred_check
    _
  $region31: #{gat_forward.1} parent=0 // pred_check_branch
    %846 = sbr.rel (0) target = $region33
  $region32: #{gat_forward.1} parent=0 // pred_region
    _
  $region33: #{gat_forward.1} parent=0 // pred_fallthru
    _
  // Predicated region
  $region34: #{gat_forward.1} parent=0 // pred_check
    _
  $region35: #{gat_forward.1} parent=0 // pred_check_branch
    %848 = sbr.rel (0) target = $region37
  $region36: #{gat_forward.1} parent=0 // pred_region
    _
  $region37: #{gat_forward.1} parent=0 // pred_fallthru
    _

</llo_original>
